<compile_context>
chip_gen: v6e
topology: v6e:2x2x1
jax: 0.10.0
libtpu: 0.0.40
codegen_flags: <defaults>
</compile_context>

<pallas_src>
import functools
import math

import jax
import jax.numpy as jnp
from jax.experimental import pallas as pl
from jax.experimental.pallas import tpu as pltpu

LANE = 128
SUBLANE = 8
VMEM_LIMIT = 48 * 1024 * 1024


def _round_up(n, m):
    return (n + m - 1) // m * m


def _ceil_div(a, b):
    return -(-a // b)


# ----------------------------------------------------------------------------
# Kernels
# ----------------------------------------------------------------------------
def _actor_critic_kernel(x_ref, w1_ref, b1_ref, w2_ref, b2_ref, w3_ref, b3_ref,
                         out_ref, *, action_dim):
    """Packed actor+critic heads: 3 lane-dense (..,128) matmuls, fused tanh.

    Output layout: cols [0, action_dim) = tanh(actor), col action_dim = critic
    value (no tanh), remaining lanes are zero.
    """
    x = x_ref[...]
    h = jnp.tanh(jnp.dot(x, w1_ref[...], preferred_element_type=jnp.float32)
                 + b1_ref[...])
    h = jnp.tanh(jnp.dot(h, w2_ref[...], preferred_element_type=jnp.float32)
                 + b2_ref[...])
    y = (jnp.dot(h, w3_ref[...], preferred_element_type=jnp.float32)
         + b3_ref[...])
    col = jax.lax.broadcasted_iota(jnp.int32, y.shape, 1)
    out_ref[...] = jnp.where(col < action_dim, jnp.tanh(y), y).astype(
        out_ref.dtype)


def _fc_heads_kernel(z_ref, w1_ref, b1_ref, w2_ref, b2_ref, out_ref, *,
                     action_dim):
    """Packed fc_actor + fc_critic heads.

    One z @ (3136,1024) bf16 matmul (actor hidden cols [0,512), critic hidden
    cols [512,1024)), ReLU, one (1024,128) matmul. Output: softmax probs in
    cols [0, action_dim), critic value at col action_dim.
    """
    z = z_ref[...].astype(jnp.bfloat16)          # in-kernel cast (VPU filler)
    h = jnp.dot(z, w1_ref[...], preferred_element_type=jnp.float32) + b1_ref[...]
    h = jnp.maximum(h, 0.0).astype(jnp.bfloat16)
    y = jnp.dot(h, w2_ref[...], preferred_element_type=jnp.float32) + b2_ref[...]
    col = jax.lax.broadcasted_iota(jnp.int32, y.shape, 1)
    logits = jnp.where(col < action_dim, y, -jnp.inf)
    logits = logits - jnp.max(logits, axis=-1, keepdims=True)
    e = jnp.exp(logits)
    denom = jnp.sum(e, axis=-1, keepdims=True)
    probs = e * pl.reciprocal(denom, approx=True)
    out_ref[...] = jnp.where(col < action_dim, probs, y).astype(out_ref.dtype)


# ----------------------------------------------------------------------------
# Tiling helpers
# ----------------------------------------------------------------------------
def _batch_tiling(batch, max_tile):
    """Balanced batch tile: padding waste < one tile, grid >= 2 when possible
    (so v7x megacore sharding of the 'parallel' axis engages)."""
    b8 = _round_up(batch, SUBLANE)
    n_tiles = _ceil_div(b8, max_tile)
    if b8 >= 2 * SUBLANE:
        n_tiles = max(n_tiles, 2)
    tb = _round_up(_ceil_div(b8, n_tiles), SUBLANE)
    n_tiles = _ceil_div(b8, tb)
    return tb, n_tiles * tb


def _pad_rows(a, rows):
    if a.shape[0] == rows:
        return a
    return jnp.pad(a, ((0, rows - a.shape[0]), (0, 0)))


def _param_bytes(params):
    return sum(int(p.size) * jnp.dtype(p.dtype).itemsize for p in params)


# ----------------------------------------------------------------------------
# pallas_call wrappers (batch-tiled grid, weights resident)
# ----------------------------------------------------------------------------
def _actor_critic_forward(x, params, action_dim):
    batch, state_dim = x.shape
    out_cols = params[-1].shape[1]
    tb, b_pad = _batch_tiling(batch, 512)
    xp = _pad_rows(x, b_pad)
    grid = (b_pad // tb,)

    def batch_spec(cols):
        return pl.BlockSpec((tb, cols), lambda i: (i, 0))

    def w_spec(a):
        return pl.BlockSpec(a.shape, lambda i: (0, 0))

    cost = pl.CostEstimate(
        flops=2 * b_pad * (state_dim * LANE + LANE * LANE + LANE * out_cols),
        transcendentals=b_pad * (LANE + LANE + out_cols),
        bytes_accessed=b_pad * state_dim * 4 + _param_bytes(params)
        + b_pad * out_cols * 4)

    kernel = functools.partial(_actor_critic_kernel, action_dim=action_dim)
    out = pl.pallas_call(
        kernel,
        out_shape=jax.ShapeDtypeStruct((b_pad, out_cols), jnp.float32),
        grid=grid,
        in_specs=[batch_spec(state_dim)] + [w_spec(a) for a in params],
        out_specs=batch_spec(out_cols),
        cost_estimate=cost,
        compiler_params=pltpu.CompilerParams(
            dimension_semantics=("parallel",),
            vmem_limit_bytes=VMEM_LIMIT),
    )(xp, *params)
    return out[:batch, :action_dim], out[:batch, action_dim:action_dim + 1]


def _fc_forward(z, params, action_dim):
    batch, feat = z.shape
    hidden = params[0].shape[1]          # 1024 (merged actor|critic hidden)
    out_cols = params[-1].shape[1]
    tb, b_pad = _batch_tiling(batch, 512)
    zp = _pad_rows(z, b_pad)             # f32 straight in; cast in-kernel
    grid = (b_pad // tb,)

    def batch_spec(cols):
        return pl.BlockSpec((tb, cols), lambda i: (i, 0))

    def w_spec(a):
        return pl.BlockSpec(a.shape, lambda i: (0, 0))

    cost = pl.CostEstimate(
        flops=2 * b_pad * (feat * hidden + hidden * out_cols),
        transcendentals=b_pad * out_cols,
        bytes_accessed=b_pad * feat * 4 + _param_bytes(params)
        + b_pad * out_cols * 4)

    kernel = functools.partial(_fc_heads_kernel, action_dim=action_dim)
    out = pl.pallas_call(
        kernel,
        out_shape=jax.ShapeDtypeStruct((b_pad, out_cols), jnp.float32),
        grid=grid,
        in_specs=[batch_spec(feat)] + [w_spec(a) for a in params],
        out_specs=batch_spec(out_cols),
        cost_estimate=cost,
        compiler_params=pltpu.CompilerParams(
            dimension_semantics=("parallel",),
            vmem_limit_bytes=VMEM_LIMIT),
    )(zp, *params)
    return out[:batch, :action_dim], out[:batch, action_dim:action_dim + 1]


_actor_critic_forward = jax.jit(_actor_critic_forward, static_argnums=(2,))
_fc_forward = jax.jit(_fc_forward, static_argnums=(2,))


# ----------------------------------------------------------------------------
# Parameter construction (mimics nn.Linear U(-1/sqrt(fan_in)); packed layouts)
# ----------------------------------------------------------------------------
def _uniform_linear(key, in_dim, out_dim):
    kw, kb = jax.random.split(key)
    bound = 1.0 / math.sqrt(in_dim)
    w = jax.random.uniform(kw, (in_dim, out_dim), jnp.float32, -bound, bound)
    b = jax.random.uniform(kb, (out_dim,), jnp.float32, -bound, bound)
    return w, b


class ActorCriticPallas:
    def __init__(self, state_dim, action_dim, key):
        self.state_dim = state_dim
        self.action_dim = action_dim
        flat_dim = 64 * 7 * 7
        out_cols = _round_up(action_dim + 1, LANE)   # probs + value lanes
        keys = jax.random.split(key, 10)

        # raw (PyTorch-layout, in x out) weights -- also used by the reference
        aw1, ab1 = _uniform_linear(keys[0], state_dim, 64)
        aw2, ab2 = _uniform_linear(keys[1], 64, 32)
        aw3, ab3 = _uniform_linear(keys[2], 32, action_dim)
        cw1, cb1 = _uniform_linear(keys[3], state_dim, 64)
        cw2, cb2 = _uniform_linear(keys[4], 64, 32)
        cw3, cb3 = _uniform_linear(keys[5], 32, 1)
        fw1, fb1 = _uniform_linear(keys[6], flat_dim, 512)
        fw2, fb2 = _uniform_linear(keys[7], 512, action_dim)
        gw1, gb1 = _uniform_linear(keys[8], flat_dim, 512)
        gw2, gb2 = _uniform_linear(keys[9], 512, 1)
        self.ac_raw = (aw1, ab1, aw2, ab2, aw3, ab3,
                       cw1, cb1, cw2, cb2, cw3, cb3)
        self.fc_raw = (fw1, fb1, fw2, fb2, gw1, gb1, gw2, gb2)

        # --- packed actor/critic (f32): 3 lane-dense matmuls ---
        W1 = jnp.concatenate([aw1, cw1], axis=1)                   # (state,128)
        B1 = jnp.concatenate([ab1, cb1])[None, :]                  # (1,128)
        W2 = (jnp.zeros((128, 128), jnp.float32)
              .at[:64, :32].set(aw2)
              .at[64:128, 32:64].set(cw2))                         # block-diag
        B2 = (jnp.zeros((1, 128), jnp.float32)
              .at[0, :32].set(ab2).at[0, 32:64].set(cb2))
        W3 = (jnp.zeros((128, out_cols), jnp.float32)
              .at[:32, :action_dim].set(aw3)
              .at[32:64, action_dim:action_dim + 1].set(cw3))
        B3 = (jnp.zeros((1, out_cols), jnp.float32)
              .at[0, :action_dim].set(ab3).at[0, action_dim].set(cb3[0]))
        self.ac_params = (W1, B1, W2, B2, W3, B3)

        # --- packed fc heads (bf16 weights, f32 biases) ---
        FW1 = jnp.concatenate([fw1, gw1], axis=1).astype(jnp.bfloat16)  # (3136,1024)
        FB1 = jnp.concatenate([fb1, gb1])[None, :]                       # (1,1024)
        FW2 = (jnp.zeros((1024, out_cols), jnp.float32)
               .at[:512, :action_dim].set(fw2)
               .at[512:, action_dim:action_dim + 1].set(gw2)
               ).astype(jnp.bfloat16)
        FB2 = (jnp.zeros((1, out_cols), jnp.float32)
               .at[0, :action_dim].set(fb2).at[0, action_dim].set(gb2[0]))
        self.fc_params = (FW1, FB1, FW2, FB2)

    # fused entry points (single launch each)
    def actor_critic(self, x):
        return _actor_critic_forward(x, self.ac_params, self.action_dim)

    def fc_heads(self, z):
        return _fc_forward(z, self.fc_params, self.action_dim)

    # per-head convenience wrappers (same semantics as the PyTorch Sequentials)
    def actor(self, x):
        return self.actor_critic(x)[0]

    def critic(self, x):
        return self.actor_critic(x)[1]

    def fc_actor(self, z):
        return self.fc_heads(z)[0]

    def fc_critic(self, z):
        return self.fc_heads(z)[1]


# ----------------------------------------------------------------------------
# Pure-JAX references (use the raw / unpacked PyTorch-equivalent weights)
# ----------------------------------------------------------------------------
def _ref_actor_critic(x, raw):
    aw1, ab1, aw2, ab2, aw3, ab3, cw1, cb1, cw2, cb2, cw3, cb3 = raw
    ha = jnp.tanh(x @ aw1 + ab1)
    ha = jnp.tanh(ha @ aw2 + ab2)
    a = jnp.tanh(ha @ aw3 + ab3)
    hc = jnp.tanh(x @ cw1 + cb1)
    hc = jnp.tanh(hc @ cw2 + cb2)
    c = hc @ cw3 + cb3
    return a, c


def _ref_fc(z, raw):
    fw1, fb1, fw2, fb2, gw1, gb1, gw2, gb2 = raw
    zb = z.astype(jnp.bfloat16)
    ha = jnp.maximum(
        jnp.dot(zb, fw1.astype(jnp.bfloat16),
                preferred_element_type=jnp.float32) + fb1, 0.0)
    logits = (jnp.dot(ha.astype(jnp.bfloat16), fw2.astype(jnp.bfloat16),
                      preferred_element_type=jnp.float32) + fb2)
    probs = jax.nn.softmax(logits, axis=-1)
    hc = jnp.maximum(
        jnp.dot(zb, gw1.astype(jnp.bfloat16),
                preferred_element_type=jnp.float32) + gb1, 0.0)
    val = (jnp.dot(hc.astype(jnp.bfloat16), gw2.astype(jnp.bfloat16),
                   preferred_element_type=jnp.float32) + gb2)
    return probs, val


if __name__ == "__main__":
    key = jax.random.PRNGKey(0)
    k_model, k_x, k_z = jax.random.split(key, 3)

    batch = 2
    state_dim = 16
    action_dim = 4
    flat_dim = 64 * 7 * 7  # 3136

    model = ActorCriticPallas(state_dim, action_dim, k_model)

    x = jax.random.normal(k_x, (batch, state_dim), jnp.float32)
    z = jax.random.normal(k_z, (batch, flat_dim), jnp.float32)

    a, c = model.actor_critic(x)       # one fused launch
    fa, fc = model.fc_heads(z)         # one fused launch
    jax.block_until_ready((a, c, fa, fc))

    ra, rc = _ref_actor_critic(x, model.ac_raw)
    rfa, rfc = _ref_fc(z, model.fc_raw)

    assert a.shape == (batch, action_dim) and c.shape == (batch, 1)
    assert fa.shape == (batch, action_dim) and fc.shape == (batch, 1)
    assert jnp.allclose(a, ra, atol=1e-5, rtol=1e-5)
    assert jnp.allclose(c, rc, atol=1e-5, rtol=1e-5)
    assert jnp.allclose(fa, rfa, atol=5e-3, rtol=5e-3)
    assert jnp.allclose(fc, rfc, atol=5e-3, rtol=5e-3)
    assert jnp.allclose(jnp.sum(fa, axis=-1), 1.0, atol=5e-3)

    print("KERNEL_OK")
</pallas_src>

<mosaic_0001>
module attributes {stable_mosaic.version = 11 : i64} {
  func.func @_actor_critic_kernel(%arg0: i32, %arg1: memref<8x16xf32, #tpu.memory_space<vmem>>, %arg2: memref<16x128xf32, #tpu.memory_space<vmem>>, %arg3: memref<1x128xf32, #tpu.memory_space<vmem>>, %arg4: memref<128x128xf32, #tpu.memory_space<vmem>>, %arg5: memref<1x128xf32, #tpu.memory_space<vmem>>, %arg6: memref<128x128xf32, #tpu.memory_space<vmem>>, %arg7: memref<1x128xf32, #tpu.memory_space<vmem>>, %arg8: memref<8x128xf32, #tpu.memory_space<vmem>>) attributes {dimension_semantics = [#tpu.dimension_semantics<parallel>], iteration_bounds = array<i64: 1>, scalar_prefetch = 0 : i64, scratch_operands = 0 : i64, tpu.core_type = #tpu.core_type<tc>, window_params = [{transform_indices = @transform_0, window_bounds = array<i64: 8, 16>}, {pipeline_mode = #tpu.pipeline_mode<synchronous>, transform_indices = @transform_1, window_bounds = array<i64: 16, 128>}, {pipeline_mode = #tpu.pipeline_mode<synchronous>, transform_indices = @transform_2, window_bounds = array<i64: 1, 128>}, {pipeline_mode = #tpu.pipeline_mode<synchronous>, transform_indices = @transform_3, window_bounds = array<i64: 128, 128>}, {pipeline_mode = #tpu.pipeline_mode<synchronous>, transform_indices = @transform_4, window_bounds = array<i64: 1, 128>}, {pipeline_mode = #tpu.pipeline_mode<synchronous>, transform_indices = @transform_5, window_bounds = array<i64: 128, 128>}, {pipeline_mode = #tpu.pipeline_mode<synchronous>, transform_indices = @transform_6, window_bounds = array<i64: 1, 128>}, {transform_indices = @transform_7, window_bounds = array<i64: 8, 128>}]} {
    %c0 = arith.constant 0 : index
    %c0_0 = arith.constant 0 : index
    %0 = vector.load %arg1[%c0, %c0_0] : memref<8x16xf32, #tpu.memory_space<vmem>>, vector<8x16xf32>
    %c0_1 = arith.constant 0 : index
    %c0_2 = arith.constant 0 : index
    %1 = vector.load %arg2[%c0_1, %c0_2] : memref<16x128xf32, #tpu.memory_space<vmem>>, vector<16x128xf32>
    %cst = arith.constant dense<0.000000e+00> : vector<8x128xf32>
    %2 = tpu.matmul %0, %1, %cst {dimension_numbers = #tpu.dot_dimension_numbers<[1], [0], [0], [1], [0, 0, 1, 1], [], []>} : vector<8x16xf32>, vector<16x128xf32>, vector<8x128xf32> -> vector<8x128xf32>
    %c0_3 = arith.constant 0 : index
    %c0_4 = arith.constant 0 : index
    %3 = vector.load %arg3[%c0_3, %c0_4] : memref<1x128xf32, #tpu.memory_space<vmem>>, vector<1x128xf32>
    %4 = vector.broadcast %3 : vector<1x128xf32> to vector<8x128xf32>
    %5 = arith.addf %2, %4 : vector<8x128xf32>
    %6 = math.tanh %5 : vector<8x128xf32>
    %c0_5 = arith.constant 0 : index
    %c0_6 = arith.constant 0 : index
    %7 = vector.load %arg4[%c0_5, %c0_6] : memref<128x128xf32, #tpu.memory_space<vmem>>, vector<128x128xf32>
    %cst_7 = arith.constant dense<0.000000e+00> : vector<8x128xf32>
    %8 = tpu.matmul %6, %7, %cst_7 {dimension_numbers = #tpu.dot_dimension_numbers<[1], [0], [0], [1], [0, 0, 1, 1], [], []>} : vector<8x128xf32>, vector<128x128xf32>, vector<8x128xf32> -> vector<8x128xf32>
    %c0_8 = arith.constant 0 : index
    %c0_9 = arith.constant 0 : index
    %9 = vector.load %arg5[%c0_8, %c0_9] : memref<1x128xf32, #tpu.memory_space<vmem>>, vector<1x128xf32>
    %10 = vector.broadcast %9 : vector<1x128xf32> to vector<8x128xf32>
    %11 = arith.addf %8, %10 : vector<8x128xf32>
    %12 = math.tanh %11 : vector<8x128xf32>
    %c0_10 = arith.constant 0 : index
    %c0_11 = arith.constant 0 : index
    %13 = vector.load %arg6[%c0_10, %c0_11] : memref<128x128xf32, #tpu.memory_space<vmem>>, vector<128x128xf32>
    %cst_12 = arith.constant dense<0.000000e+00> : vector<8x128xf32>
    %14 = tpu.matmul %12, %13, %cst_12 {dimension_numbers = #tpu.dot_dimension_numbers<[1], [0], [0], [1], [0, 0, 1, 1], [], []>} : vector<8x128xf32>, vector<128x128xf32>, vector<8x128xf32> -> vector<8x128xf32>
    %c0_13 = arith.constant 0 : index
    %c0_14 = arith.constant 0 : index
    %15 = vector.load %arg7[%c0_13, %c0_14] : memref<1x128xf32, #tpu.memory_space<vmem>>, vector<1x128xf32>
    %16 = vector.broadcast %15 : vector<1x128xf32> to vector<8x128xf32>
    %17 = arith.addf %14, %16 : vector<8x128xf32>
    %18 = tpu.iota {dimensions = array<i32: 1>} : vector<8x128xi32>
    %c4_i32 = arith.constant 4 : i32
    %19 = vector.broadcast %c4_i32 : i32 to vector<8x128xi32>
    %20 = arith.cmpi slt, %18, %19 : vector<8x128xi32>
    %21 = math.tanh %17 : vector<8x128xf32>
    %22 = arith.select %20, %21, %17 : vector<8x128xi1>, vector<8x128xf32>
    %c0_15 = arith.constant 0 : index
    %c0_16 = arith.constant 0 : index
    %23 = vector.load %arg8[%c0_15, %c0_16] : memref<8x128xf32, #tpu.memory_space<vmem>>, vector<8x128xf32>
    tpu.vector_store %arg8[%c0_15, %c0_16], %22 {strides = array<i32>} : memref<8x128xf32, #tpu.memory_space<vmem>>, vector<8x128xf32>,
    return
  }
  func.func @transform_0(%arg0: i32) -> (i32, i32) {
    %c0_i32 = arith.constant 0 : i32
    %c0_i32_0 = arith.constant 0 : i32
    return %arg0, %c0_i32 : i32, i32
  }
  func.func @transform_1(%arg0: i32) -> (i32, i32) {
    %c0_i32 = arith.constant 0 : i32
    %c0_i32_0 = arith.constant 0 : i32
    %c0_i32_1 = arith.constant 0 : i32
    return %c0_i32, %c0_i32_0 : i32, i32
  }
  func.func @transform_2(%arg0: i32) -> (i32, i32) {
    %c0_i32 = arith.constant 0 : i32
    %c0_i32_0 = arith.constant 0 : i32
    %c0_i32_1 = arith.constant 0 : i32
    return %c0_i32, %c0_i32_0 : i32, i32
  }
  func.func @transform_3(%arg0: i32) -> (i32, i32) {
    %c0_i32 = arith.constant 0 : i32
    %c0_i32_0 = arith.constant 0 : i32
    %c0_i32_1 = arith.constant 0 : i32
    return %c0_i32, %c0_i32_0 : i32, i32
  }
  func.func @transform_4(%arg0: i32) -> (i32, i32) {
    %c0_i32 = arith.constant 0 : i32
    %c0_i32_0 = arith.constant 0 : i32
    %c0_i32_1 = arith.constant 0 : i32
    return %c0_i32, %c0_i32_0 : i32, i32
  }
  func.func @transform_5(%arg0: i32) -> (i32, i32) {
    %c0_i32 = arith.constant 0 : i32
    %c0_i32_0 = arith.constant 0 : i32
    %c0_i32_1 = arith.constant 0 : i32
    return %c0_i32, %c0_i32_0 : i32, i32
  }
  func.func @transform_6(%arg0: i32) -> (i32, i32) {
    %c0_i32 = arith.constant 0 : i32
    %c0_i32_0 = arith.constant 0 : i32
    %c0_i32_1 = arith.constant 0 : i32
    return %c0_i32, %c0_i32_0 : i32, i32
  }
  func.func @transform_7(%arg0: i32) -> (i32, i32) {
    %c0_i32 = arith.constant 0 : i32
    %c0_i32_0 = arith.constant 0 : i32
    return %arg0, %c0_i32 : i32, i32
  }
}

</mosaic_0001>

<llo_original>
// kernel: _actor_critic_forward.1
$region0: #{_actor_critic_forward.1}
  #allocation0 [shape = 'u32[]', space=smem, size = 0x4, offset = 0x4, fixed_abs, tag = 'smem constant byte address 0x4 - core index']
  #allocation1 [shape = 'u32[144,128]{1,0:T(1,128)}', space=vmem, size = 0x12000, scoped, tag = 'internal scratch']
  %s0 = inlined_call_operand.vmem [shape: f32[8,16], index: 0, kind: input, shape index: {}]
  %s1 = inlined_call_operand.hbm [shape: f32[16,128], index: 1, kind: input, shape index: {}]
  %s2 = inlined_call_operand.vmem [shape: f32[1,128], index: 2, kind: input, shape index: {}]
  %s3 = inlined_call_operand.hbm [shape: f32[128,128], index: 3, kind: input, shape index: {}]
  %s4 = inlined_call_operand.vmem [shape: f32[1,128], index: 4, kind: input, shape index: {}]
  %s5 = inlined_call_operand.hbm [shape: f32[128,128], index: 5, kind: input, shape index: {}]
  %s6 = inlined_call_operand.vmem [shape: f32[1,128], index: 6, kind: input, shape index: {}]
  %s7 = inlined_call_operand.vmem [shape: f32[8,128], index: 7, kind: output, shape index: {}]
  %s8 = sld [smem:[#allocation0]]
  $region50: #{_actor_critic_forward.1} parent=0
    _
  %s10 = ssub.s32 1, %s8
  %s11 = scalar_select 0, %s10, %s8
  $region1: #{_actor_critic_forward.1} parent=0
    #allocation2 [shape = 'u8[8192]{0}', space=vmem, size = 0x2000, scoped, tag = 'input window, operand 1, single buffered']
    #allocation3 [shape = 's32[1]{0}', space=sflag, size = 0x4, scoped, tag = 'scoped memory for _actor_critic_forward.1']
    #allocation4 [shape = 'u8[65536]{0}', space=vmem, size = 0x10000, scoped, tag = 'input window, operand 3, single buffered']
    #allocation5 [shape = 's32[1]{0}', space=sflag, size = 0x4, scoped, tag = 'scoped memory for _actor_critic_forward.1']
    #allocation6 [shape = 'u8[65536]{0}', space=vmem, size = 0x10000, scoped, tag = 'input window, operand 5, single buffered']
    %12 = vsyncpa [#allocation3], 0
    %13 = vsyncpa [#allocation5], 0
    // Predicated region
    $region2: #{_actor_critic_forward.1} parent=1 // pred_check
      _
    $region3: #{_actor_critic_forward.1} parent=1 // pred_check_branch
      %15 = sbr.rel (0) target = $region5
    $region4: #{_actor_critic_forward.1} parent=1 // pred_region
      _
    $region5: #{_actor_critic_forward.1} parent=1 // pred_fallthru
      _
    // Predicated region
    $region6: #{_actor_critic_forward.1} parent=1 // pred_check
      _
    $region7: #{_actor_critic_forward.1} parent=1 // pred_check_branch
      %17 = sbr.rel (0) target = $region9
    $region8: #{_actor_critic_forward.1} parent=1 // pred_region
      %s19 = ssub.s32 256, 256
      %20 = vsyncadd [#allocation3], %s19
      %s21 = sshll.u32 [#allocation2], 4
      %s22 = int_to_ptr.vmem [resolvable:$true] %s21
      %27 = dma.hbm_to_vmem [thread:$0]  %s1, 256, %s22, [#allocation3], 128, 128, 8
    $region9: #{_actor_critic_forward.1} parent=1 // pred_fallthru
      _
    // Predicated region
    $region10: #{_actor_critic_forward.1} parent=1 // pred_check
      _
    $region11: #{_actor_critic_forward.1} parent=1 // pred_check_branch
      %29 = sbr.rel (0) target = $region13
    $region12: #{_actor_critic_forward.1} parent=1 // pred_region
      _
    $region13: #{_actor_critic_forward.1} parent=1 // pred_fallthru
      _
    // Predicated region
    $region14: #{_actor_critic_forward.1} parent=1 // pred_check
      _
    $region15: #{_actor_critic_forward.1} parent=1 // pred_check_branch
      %31 = sbr.rel (0) target = $region17
    $region16: #{_actor_critic_forward.1} parent=1 // pred_region
      %s33 = ssub.s32 2048, 2048
      %34 = vsyncadd [#allocation5], %s33
      %s35 = sshll.u32 [#allocation4], 4
      %s36 = int_to_ptr.vmem [resolvable:$true] %s35
      %41 = dma.hbm_to_vmem [thread:$0]  %s3, 2048, %s36, [#allocation5], 128, 128, 8
    $region17: #{_actor_critic_forward.1} parent=1 // pred_fallthru
      _
    // Predicated region
    $region18: #{_actor_critic_forward.1} parent=1 // pred_check
      _
    $region19: #{_actor_critic_forward.1} parent=1 // pred_check_branch
      %43 = sbr.rel (0) target = $region21
    $region20: #{_actor_critic_forward.1} parent=1 // pred_region
      _
    $region21: #{_actor_critic_forward.1} parent=1 // pred_fallthru
      _
    // Predicated region
    $region22: #{_actor_critic_forward.1} parent=1 // pred_check
      _
    $region23: #{_actor_critic_forward.1} parent=1 // pred_check_branch
      %45 = sbr.rel (0) target = $region25
    $region24: #{_actor_critic_forward.1} parent=1 // pred_region
      %s47 = ssub.s32 2048, 2048
      %48 = vsyncadd [#allocation5], %s47
      %s49 = sshll.u32 [#allocation6], 4
      %s50 = int_to_ptr.vmem [resolvable:$true] %s49
      %55 = dma.hbm_to_vmem [thread:$0]  %s5, 2048, %s50, [#allocation5], 128, 128, 8
    $region25: #{_actor_critic_forward.1} parent=1 // pred_fallthru
      _
    // Predicated region
    $region26: #{_actor_critic_forward.1} parent=1 // pred_check
      _
    $region27: #{_actor_critic_forward.1} parent=1 // pred_check_branch
      %57 = sbr.rel (0) target = $region29
    $region28: #{_actor_critic_forward.1} parent=1 // pred_region
      _
    $region29: #{_actor_critic_forward.1} parent=1 // pred_fallthru
      _
    // Predicated region
    $region30: #{_actor_critic_forward.1} parent=1 // pred_check
      _
    $region31: #{_actor_critic_forward.1} parent=1 // pred_check_branch
      %59 = sbr.rel (0) target = $region33
    $region32: #{_actor_critic_forward.1} parent=1 // pred_region
      %60 = dma.done [#allocation3], 256
    $region33: #{_actor_critic_forward.1} parent=1 // pred_fallthru
      _
    // Predicated region
    $region34: #{_actor_critic_forward.1} parent=1 // pred_check
      _
    $region35: #{_actor_critic_forward.1} parent=1 // pred_check_branch
      %62 = sbr.rel (0) target = $region37
    $region36: #{_actor_critic_forward.1} parent=1 // pred_region
      %63 = dma.done [#allocation5], 2048
    $region37: #{_actor_critic_forward.1} parent=1 // pred_fallthru
      _
    // Predicated region
    $region38: #{_actor_critic_forward.1} parent=1 // pred_check
      _
    $region39: #{_actor_critic_forward.1} parent=1 // pred_check_branch
      %65 = sbr.rel (0) target = $region41
    $region40: #{_actor_critic_forward.1} parent=1 // pred_region
      %66 = dma.done [#allocation5], 2048
    $region41: #{_actor_critic_forward.1} parent=1 // pred_fallthru
      _
    %v67 = vld [vmem:[%s0] sm:$0xff]
    %v68 = vld [vmem:[#allocation2] sm:$0xff]
    %v69 = vld [vmem:[#allocation2 + $0x8] sm:$0xff]
    %v70 = vld [vmem:[%s2] sm:$0x1]
    %v72 = vlaneseq
    %v73 = vshrl.u32 %v72, 7
    %v74 = vsub.s32 0, %v73
    %v75 = vrot.slane %v70, %v74
    %vm77 = vcmask 130048
    %v79 = vsel %vm77, %v67, 0
    %81 = vmatprep.subr.mxu0 0.0
    %82 = vmatpush1.msra.mxu0 0.0
    %83 = vmatprep.subr.mxu0 0.0
    %84 = vmatpush1.msra.mxu0 0.0
    %85 = vmatprep.subr.mxu0 0.0
    %86 = vmatpush1.msra.mxu0 0.0
    %87 = vmatprep.subr.mxu0 0.0
    %88 = vmatpush1.msra.mxu0 0.0
    %89 = vmatprep.subr.mxu0 0.0
    %90 = vmatpush1.msra.mxu0 0.0
    %91 = vmatprep.subr.mxu0 0.0
    %92 = vmatpush1.msra.mxu0 0.0
    %93 = vmatprep.subr.mxu0 0.0
    %94 = vmatpush1.msra.mxu0 0.0
    %95 = vmatprep.subr.mxu0 0.0
    %96 = vmatpush1.msra.mxu0 0.0
    %97 = vmatprep.subr.mxu0 0.0
    %98 = vmatpush1.msra.mxu0 0.0
    %99 = vmatprep.subr.mxu0 0.0
    %100 = vmatpush1.msra.mxu0 0.0
    %101 = vmatprep.subr.mxu0 0.0
    %102 = vmatpush1.msra.mxu0 0.0
    %103 = vmatprep.subr.mxu0 0.0
    %104 = vmatpush1.msra.mxu0 0.0
    %105 = vmatprep.subr.mxu0 0.0
    %106 = vmatpush1.msra.mxu0 0.0
    %107 = vmatprep.subr.mxu0 0.0
    %108 = vmatpush1.msra.mxu0 0.0
    %109 = vmatprep.subr.mxu0 0.0
    %110 = vmatpush1.msra.mxu0 %v69
    %111 = vmatprep.subr.mxu0 0.0
    %112 = vmatpush1.msra.mxu0 %v68
    %113 = vmatprep.subr.mxu0 0.0
    %114 = vmatpush2.msra.mxu0 0.0
    %115 = vmatprep.subr.mxu0 0.0
    %116 = vmatpush2.msra.mxu0 0.0
    %117 = vmatprep.subr.mxu0 0.0
    %118 = vmatpush2.msra.mxu0 0.0
    %119 = vmatprep.subr.mxu0 0.0
    %120 = vmatpush2.msra.mxu0 0.0
    %121 = vmatprep.subr.mxu0 0.0
    %122 = vmatpush2.msra.mxu0 0.0
    %123 = vmatprep.subr.mxu0 0.0
    %124 = vmatpush2.msra.mxu0 0.0
    %125 = vmatprep.subr.mxu0 0.0
    %126 = vmatpush2.msra.mxu0 0.0
    %127 = vmatprep.subr.mxu0 0.0
    %128 = vmatpush2.msra.mxu0 0.0
    %129 = vmatprep.subr.mxu0 0.0
    %130 = vmatpush2.msra.mxu0 0.0
    %131 = vmatprep.subr.mxu0 0.0
    %132 = vmatpush2.msra.mxu0 0.0
    %133 = vmatprep.subr.mxu0 0.0
    %134 = vmatpush2.msra.mxu0 0.0
    %135 = vmatprep.subr.mxu0 0.0
    %136 = vmatpush2.msra.mxu0 0.0
    %137 = vmatprep.subr.mxu0 0.0
    %138 = vmatpush2.msra.mxu0 0.0
    %139 = vmatprep.subr.mxu0 0.0
    %140 = vmatpush2.msra.mxu0 0.0
    %141 = vmatprep.subr.mxu0 0.0
    %142 = vmatpush2.msra.mxu0 0.0
    %143 = vmatprep.subr.mxu0 0.0
    %144 = vmatpush2.msra.mxu0 0.0
    %145 = vmatprep.mubr.f32.mxu0 0.0
    %146 = vmatmul.mubr.f32.gmra.mxu0 %v79
    %v147 = vpop.f32.mrf.mxu0
    %v148 = vadd.f32 %v75, %v147
    %v149 = vpop.f32.mrf.mxu0
    %150 = vdwg.mxu0
    %v151 = vtanh.pop %v148
    %v152 = vld [vmem:[#allocation4] sm:$0xff]
    %v153 = vld [vmem:[#allocation4 + $0x8] sm:$0xff]
    %v154 = vld [vmem:[#allocation4 + $0x10] sm:$0xff]
    %v155 = vld [vmem:[#allocation4 + $0x18] sm:$0xff]
    %v156 = vld [vmem:[#allocation4 + $0x20] sm:$0xff]
    %v157 = vld [vmem:[#allocation4 + $0x28] sm:$0xff]
    %v158 = vld [vmem:[#allocation4 + $0x30] sm:$0xff]
    %v159 = vld [vmem:[#allocation4 + $0x38] sm:$0xff]
    %v160 = vld [vmem:[#allocation4 + $0x40] sm:$0xff]
    %v161 = vld [vmem:[#allocation4 + $0x48] sm:$0xff]
    %v162 = vld [vmem:[#allocation4 + $0x50] sm:$0xff]
    %v163 = vld [vmem:[#allocation4 + $0x58] sm:$0xff]
    %v164 = vld [vmem:[#allocation4 + $0x60] sm:$0xff]
    %v165 = vld [vmem:[#allocation4 + $0x68] sm:$0xff]
    %v166 = vld [vmem:[#allocation4 + $0x70] sm:$0xff]
    %v167 = vld [vmem:[#allocation4 + $0x78] sm:$0xff]
    %v168 = vld [vmem:[%s4] sm:$0x1]
    %v170 = vlaneseq
    %v171 = vshrl.u32 %v170, 7
    %v172 = vsub.s32 0, %v171
    %v173 = vrot.slane %v168, %v172
    %175 = vmatprep.subr.mxu0 0.0
    %176 = vmatpush1.msra.mxu0 %v167
    %177 = vmatprep.subr.mxu0 0.0
    %178 = vmatpush1.msra.mxu0 %v166
    %179 = vmatprep.subr.mxu0 0.0
    %180 = vmatpush1.msra.mxu0 %v165
    %181 = vmatprep.subr.mxu0 0.0
    %182 = vmatpush1.msra.mxu0 %v164
    %183 = vmatprep.subr.mxu0 0.0
    %184 = vmatpush1.msra.mxu0 %v163
    %185 = vmatprep.subr.mxu0 0.0
    %186 = vmatpush1.msra.mxu0 %v162
    %187 = vmatprep.subr.mxu0 0.0
    %188 = vmatpush1.msra.mxu0 %v161
    %189 = vmatprep.subr.mxu0 0.0
    %190 = vmatpush1.msra.mxu0 %v160
    %191 = vmatprep.subr.mxu0 0.0
    %192 = vmatpush1.msra.mxu0 %v159
    %193 = vmatprep.subr.mxu0 0.0
    %194 = vmatpush1.msra.mxu0 %v158
    %195 = vmatprep.subr.mxu0 0.0
    %196 = vmatpush1.msra.mxu0 %v157
    %197 = vmatprep.subr.mxu0 0.0
    %198 = vmatpush1.msra.mxu0 %v156
    %199 = vmatprep.subr.mxu0 0.0
    %200 = vmatpush1.msra.mxu0 %v155
    %201 = vmatprep.subr.mxu0 0.0
    %202 = vmatpush1.msra.mxu0 %v154
    %203 = vmatprep.subr.mxu0 0.0
    %204 = vmatpush1.msra.mxu0 %v153
    %205 = vmatprep.subr.mxu0 0.0
    %206 = vmatpush1.msra.mxu0 %v152
    %207 = vmatprep.subr.mxu0 0.0
    %208 = vmatpush2.msra.mxu0 0.0
    %209 = vmatprep.subr.mxu0 0.0
    %210 = vmatpush2.msra.mxu0 0.0
    %211 = vmatprep.subr.mxu0 0.0
    %212 = vmatpush2.msra.mxu0 0.0
    %213 = vmatprep.subr.mxu0 0.0
    %214 = vmatpush2.msra.mxu0 0.0
    %215 = vmatprep.subr.mxu0 0.0
    %216 = vmatpush2.msra.mxu0 0.0
    %217 = vmatprep.subr.mxu0 0.0
    %218 = vmatpush2.msra.mxu0 0.0
    %219 = vmatprep.subr.mxu0 0.0
    %220 = vmatpush2.msra.mxu0 0.0
    %221 = vmatprep.subr.mxu0 0.0
    %222 = vmatpush2.msra.mxu0 0.0
    %223 = vmatprep.subr.mxu0 0.0
    %224 = vmatpush2.msra.mxu0 0.0
    %225 = vmatprep.subr.mxu0 0.0
    %226 = vmatpush2.msra.mxu0 0.0
    %227 = vmatprep.subr.mxu0 0.0
    %228 = vmatpush2.msra.mxu0 0.0
    %229 = vmatprep.subr.mxu0 0.0
    %230 = vmatpush2.msra.mxu0 0.0
    %231 = vmatprep.subr.mxu0 0.0
    %232 = vmatpush2.msra.mxu0 0.0
    %233 = vmatprep.subr.mxu0 0.0
    %234 = vmatpush2.msra.mxu0 0.0
    %235 = vmatprep.subr.mxu0 0.0
    %236 = vmatpush2.msra.mxu0 0.0
    %237 = vmatprep.subr.mxu0 0.0
    %238 = vmatpush2.msra.mxu0 0.0
    %239 = vmatprep.mubr.f32.mxu0 0.0
    %240 = vmatmul.mubr.f32.gmra.mxu0 %v151
    %v241 = vpop.f32.mrf.mxu0
    %v242 = vadd.f32 %v173, %v241
    %v243 = vpop.f32.mrf.mxu0
    %244 = vdwg.mxu0
    %v245 = vtanh.pop %v242
    %v246 = vld [vmem:[#allocation6] sm:$0xff]
    %v247 = vld [vmem:[#allocation6 + $0x8] sm:$0xff]
    %v248 = vld [vmem:[#allocation6 + $0x10] sm:$0xff]
    %v249 = vld [vmem:[#allocation6 + $0x18] sm:$0xff]
    %v250 = vld [vmem:[#allocation6 + $0x20] sm:$0xff]
    %v251 = vld [vmem:[#allocation6 + $0x28] sm:$0xff]
    %v252 = vld [vmem:[#allocation6 + $0x30] sm:$0xff]
    %v253 = vld [vmem:[#allocation6 + $0x38] sm:$0xff]
    %v254 = vld [vmem:[#allocation6 + $0x40] sm:$0xff]
    %v255 = vld [vmem:[#allocation6 + $0x48] sm:$0xff]
    %v256 = vld [vmem:[#allocation6 + $0x50] sm:$0xff]
    %v257 = vld [vmem:[#allocation6 + $0x58] sm:$0xff]
    %v258 = vld [vmem:[#allocation6 + $0x60] sm:$0xff]
    %v259 = vld [vmem:[#allocation6 + $0x68] sm:$0xff]
    %v260 = vld [vmem:[#allocation6 + $0x70] sm:$0xff]
    %v261 = vld [vmem:[#allocation6 + $0x78] sm:$0xff]
    %v262 = vld [vmem:[%s6] sm:$0x1]
    %v264 = vlaneseq
    %v265 = vshrl.u32 %v264, 7
    %v266 = vsub.s32 0, %v265
    %v267 = vrot.slane %v262, %v266
    %269 = vmatprep.subr.mxu0 0.0
    %270 = vmatpush1.msra.mxu0 %v261
    %271 = vmatprep.subr.mxu0 0.0
    %272 = vmatpush1.msra.mxu0 %v260
    %273 = vmatprep.subr.mxu0 0.0
    %274 = vmatpush1.msra.mxu0 %v259
    %275 = vmatprep.subr.mxu0 0.0
    %276 = vmatpush1.msra.mxu0 %v258
    %277 = vmatprep.subr.mxu0 0.0
    %278 = vmatpush1.msra.mxu0 %v257
    %279 = vmatprep.subr.mxu0 0.0
    %280 = vmatpush1.msra.mxu0 %v256
    %281 = vmatprep.subr.mxu0 0.0
    %282 = vmatpush1.msra.mxu0 %v255
    %283 = vmatprep.subr.mxu0 0.0
    %284 = vmatpush1.msra.mxu0 %v254
    %285 = vmatprep.subr.mxu0 0.0
    %286 = vmatpush1.msra.mxu0 %v253
    %287 = vmatprep.subr.mxu0 0.0
    %288 = vmatpush1.msra.mxu0 %v252
    %289 = vmatprep.subr.mxu0 0.0
    %290 = vmatpush1.msra.mxu0 %v251
    %291 = vmatprep.subr.mxu0 0.0
    %292 = vmatpush1.msra.mxu0 %v250
    %293 = vmatprep.subr.mxu0 0.0
    %294 = vmatpush1.msra.mxu0 %v249
    %295 = vmatprep.subr.mxu0 0.0
    %296 = vmatpush1.msra.mxu0 %v248
    %297 = vmatprep.subr.mxu0 0.0
    %298 = vmatpush1.msra.mxu0 %v247
    %299 = vmatprep.subr.mxu0 0.0
    %300 = vmatpush1.msra.mxu0 %v246
    %301 = vmatprep.subr.mxu0 0.0
    %302 = vmatpush2.msra.mxu0 0.0
    %303 = vmatprep.subr.mxu0 0.0
    %304 = vmatpush2.msra.mxu0 0.0
    %305 = vmatprep.subr.mxu0 0.0
    %306 = vmatpush2.msra.mxu0 0.0
    %307 = vmatprep.subr.mxu0 0.0
    %308 = vmatpush2.msra.mxu0 0.0
    %309 = vmatprep.subr.mxu0 0.0
    %310 = vmatpush2.msra.mxu0 0.0
    %311 = vmatprep.subr.mxu0 0.0
    %312 = vmatpush2.msra.mxu0 0.0
    %313 = vmatprep.subr.mxu0 0.0
    %314 = vmatpush2.msra.mxu0 0.0
    %315 = vmatprep.subr.mxu0 0.0
    %316 = vmatpush2.msra.mxu0 0.0
    %317 = vmatprep.subr.mxu0 0.0
    %318 = vmatpush2.msra.mxu0 0.0
    %319 = vmatprep.subr.mxu0 0.0
    %320 = vmatpush2.msra.mxu0 0.0
    %321 = vmatprep.subr.mxu0 0.0
    %322 = vmatpush2.msra.mxu0 0.0
    %323 = vmatprep.subr.mxu0 0.0
    %324 = vmatpush2.msra.mxu0 0.0
    %325 = vmatprep.subr.mxu0 0.0
    %326 = vmatpush2.msra.mxu0 0.0
    %327 = vmatprep.subr.mxu0 0.0
    %328 = vmatpush2.msra.mxu0 0.0
    %329 = vmatprep.subr.mxu0 0.0
    %330 = vmatpush2.msra.mxu0 0.0
    %331 = vmatprep.subr.mxu0 0.0
    %332 = vmatpush2.msra.mxu0 0.0
    %333 = vmatprep.mubr.f32.mxu0 0.0
    %334 = vmatmul.mubr.f32.gmra.mxu0 %v245
    %v335 = vpop.f32.mrf.mxu0
    %v336 = vadd.f32 %v267, %v335
    %v337 = vpop.f32.mrf.mxu0
    %338 = vdwg.mxu0
    %v339 = vlaneseq
    %v340 = vand.u32 %v339, 127
    %vm341 = vcmp.lt.s32.totalorder %v340, 4
    %v342 = vtanh.pop %v336
    %v343 = vsel %vm341, %v342, %v336
    %344 = vst [vmem:[%s7] sm:$0xff] %v343
    // Predicated region
    $region42: #{_actor_critic_forward.1} parent=1 // pred_check
      _
    $region43: #{_actor_critic_forward.1} parent=1 // pred_check_branch
      %346 = sbr.rel (0) target = $region45
    $region44: #{_actor_critic_forward.1} parent=1 // pred_region
      _
    $region45: #{_actor_critic_forward.1} parent=1 // pred_fallthru
      _
    // Predicated region
    $region46: #{_actor_critic_forward.1} parent=1 // pred_check
      _
    $region47: #{_actor_critic_forward.1} parent=1 // pred_check_branch
      %348 = sbr.rel (0) target = $region49
    $region48: #{_actor_critic_forward.1} parent=1 // pred_region
      _
    $region49: #{_actor_critic_forward.1} parent=1 // pred_fallthru
      _
    %349 = vsyncpa [#allocation3], 1
    %350 = vsyncpa [#allocation5], 1

</llo_original>
